<compile_context>
chip_gen: v5e
topology: v5e:2x2
jax: 0.10.0
libtpu: 0.0.40
codegen_flags: <defaults>
</compile_context>

<pallas_src>
import functools

import jax
import jax.numpy as jnp
from jax.experimental import pallas as pl
from jax.experimental.pallas import tpu as pltpu


def _round_up(a, b):
    return (a + b - 1) // b * b


def _vmem_limit(need_bytes):
    """Request just what the blocks need (+margin), capped per generation."""
    try:
        cap = int(pltpu.get_tpu_info().vmem_capacity_bytes)
    except Exception:
        cap = 64 * 1024 * 1024          # conservative (v7x physical VMEM)
    budget = int(need_bytes * 1.25) + (2 << 20)
    return max(16 << 20, min(budget, cap * 3 // 4))


# --------------------------------------------------------------------------
# Phase 1: scatter-aggregate over N tiles, then emit -Lambda(aggregate).
# --------------------------------------------------------------------------
def _aggregate_kernel(use_mean, batch_ref, x_ref, wl_ref, neg_xm_ref,
                      agg_ref, cnt_ref):
    bi = pl.program_id(0)           # parallel B-slice axis (megacore)
    i = pl.program_id(1)            # arbitrary reduction axis over N tiles
    b_tile = agg_ref.shape[0]

    @pl.when(i == 0)
    def _():
        agg_ref[...] = jnp.zeros_like(agg_ref)
        if use_mean:
            cnt_ref[...] = jnp.zeros_like(cnt_ref)

    b_row = batch_ref[...]                               # (1, TN) int32, lane-dense
    tn = b_row.shape[1]
    # (B_tile, TN) one-hot built directly in the orientation the MXU consumes
    # (no in-kernel transpose); graph ids offset by this core's B slice.
    gid = jax.lax.broadcasted_iota(jnp.int32, (b_tile, tn), 0) + bi * b_tile
    match = gid == b_row                                 # (B_tile, TN) bool

    # Scatter-sum: bf16 MXU operands, f32 accumulation.
    agg_ref[...] += jnp.dot(match.astype(jnp.bfloat16),
                            x_ref[...].astype(jnp.bfloat16),
                            preferred_element_type=jnp.float32)
    if use_mean:
        # Lane reduce (XLU slot) instead of a 1-column matmul.
        cnt_ref[...] += jnp.sum(match.astype(jnp.float32), axis=-1,
                                keepdims=True)

    @pl.when(i == pl.num_programs(1) - 1)
    def _():
        agg = agg_ref[...]
        if use_mean:
            # Exact divide: runs exactly once, approx reciprocal buys nothing.
            agg = agg / jnp.maximum(cnt_ref[...], 1.0)
        # Lambda matmul in f32 (one-shot over B_tile rows -> essentially free).
        xm = jnp.dot(agg, wl_ref[...], preferred_element_type=jnp.float32)
        # Negate + bf16 so phase 2 fuses the gather and the subtraction into a
        # bf16 MXU pass (xm is rounded to bf16: consistent with the bf16
        # pipeline; documented tradeoff vs. the f32 reference).
        neg_xm_ref[...] = (-xm).astype(neg_xm_ref.dtype)


# --------------------------------------------------------------------------
# Phase 2 (parallel over N tiles): out = x @ Wg + onehot @ (-Lambda(xm)) + b
# --------------------------------------------------------------------------
def _apply_kernel(batch_ref, x_ref, wg_ref, bg_ref, neg_xm_ref, o_ref):
    b_col = batch_ref[...]                               # (TN, 1) int32
    tn = b_col.shape[0]
    b_p = neg_xm_ref.shape[0]
    gid = jax.lax.broadcasted_iota(jnp.int32, (tn, b_p), 1)
    one_hot = (b_col == gid).astype(jnp.bfloat16)        # exact 0/1 selection

    # Fused result: both matmuls are bf16 MXU passes accumulating into one f32
    # result; the gather/subtract costs one extra K=B_p pass instead of an
    # emulated-f32 matmul plus a full-tile f32 temporary.
    acc = jnp.dot(x_ref[...].astype(jnp.bfloat16), wg_ref[...],
                  preferred_element_type=jnp.float32)
    acc += jnp.dot(one_hot, neg_xm_ref[...],
                   preferred_element_type=jnp.float32)
    o_ref[...] = (acc + bg_ref[...]).astype(o_ref.dtype)


# --------------------------------------------------------------------------
# Wrapper
# --------------------------------------------------------------------------
def deepset_layer(x, batch, w_gamma, b_gamma, w_lambda, num_graphs,
                  aggregation_fn="mean", tile_n=1024):
    """x: (N, Din); batch: (N,) int; weights pre-transposed to (Din, Dout)."""
    if aggregation_fn not in ("mean", "sum"):
        raise ValueError(f"unsupported aggregation_fn: {aggregation_fn}")

    n, din = x.shape
    dout = w_gamma.shape[1]
    out_dtype = x.dtype
    out_itm = jnp.dtype(out_dtype).itemsize

    din_p = _round_up(din, 128)          # lane-dense K blocks for Gamma matmul
    dout_p = _round_up(dout, 128)        # lane-dense (unmasked) output stores

    tile_n = max(8, _round_up(min(tile_n, n), 8))
    n_p = _round_up(n, tile_n)
    nt = n_p // tile_n

    # Graph padding: multiple of 16 (bf16 sublane packing of the one-hot
    # operand); split into <=256-row slices for the megacore-parallel B axis.
    b_p = _round_up(num_graphs, 16)
    nb = pl.cdiv(b_p, 256)
    b_tile = _round_up(pl.cdiv(b_p, nb), 16)
    b_p = nb * b_tile

    # ---- operands (pad only when needed; padding is inert: zero feature rows
    # and a batch id of -1 that never matches any graph id) ----
    if (n_p, din_p) == (n, din):
        x_in = x                          # no wrapper copy; cast bf16 in-kernel
        x_itm = jnp.dtype(x.dtype).itemsize
    else:
        x_in = jnp.zeros((n_p, din_p), jnp.bfloat16).at[:n, :din].set(
            x.astype(jnp.bfloat16))
        x_itm = 2
    batch_pad = batch.astype(jnp.int32)
    if n_p != n:
        batch_pad = jnp.full((n_p,), -1, jnp.int32).at[:n].set(batch_pad)
    # Phase 1 wants a lane-dense row (1, TN); phase 2 needs the (TN, 1) column
    # orientation so the (TN, B) one-hot feeds the fused K pass directly.
    batch_rows = batch_pad.reshape(nt, 1, tile_n)
    batch_col = batch_pad.reshape(n_p, 1)

    if (din_p, dout_p) == (din, dout):
        wg_p = w_gamma.astype(jnp.bfloat16)
        wl_p = w_lambda.astype(jnp.float32)
        bg_p = b_gamma.astype(jnp.float32).reshape(1, dout_p)
    else:
        wg_p = jnp.zeros((din_p, dout_p), jnp.bfloat16).at[:din, :dout].set(
            w_gamma.astype(jnp.bfloat16))
        wl_p = jnp.zeros((din_p, dout_p), jnp.float32).at[:din, :dout].set(
            w_lambda.astype(jnp.float32))
        bg_p = jnp.zeros((1, dout_p), jnp.float32).at[0, :dout].set(
            b_gamma.astype(jnp.float32))

    # ---- Phase 1: per-set aggregation + (-Lambda) ----
    vmem1 = _vmem_limit(
        2 * tile_n * din_p * x_itm            # x tile, double-buffered
        + 2 * tile_n * 4                      # batch row tile
        + din_p * dout_p * 4                  # Wl (f32, single-buffered)
        + 2 * b_tile * dout_p * 2             # output block
        + b_tile * din_p * 4 + b_tile * 4)    # scratch accumulators
    cost1 = pl.CostEstimate(
        flops=2 * n_p * b_p * din_p + 2 * b_p * din_p * dout_p,
        transcendentals=0,
        bytes_accessed=(nb * (n_p * din_p * x_itm + n_p * 4)
                        + din_p * dout_p * 4 + b_p * dout_p * 2))
    neg_xm = pl.pallas_call(
        functools.partial(_aggregate_kernel, aggregation_fn == "mean"),
        out_shape=jax.ShapeDtypeStruct((b_p, dout_p), jnp.bfloat16),
        grid=(nb, nt),
        in_specs=[
            pl.BlockSpec((None, 1, tile_n), lambda bi, i: (i, 0, 0)),
            pl.BlockSpec((tile_n, din_p), lambda bi, i: (i, 0)),
            pl.BlockSpec((din_p, dout_p), lambda bi, i: (0, 0),
                         pipeline_mode=pl.Buffered(1)),      # loop-invariant
        ],
        out_specs=pl.BlockSpec((b_tile, dout_p), lambda bi, i: (bi, 0)),
        scratch_shapes=[pltpu.VMEM((b_tile, din_p), jnp.float32),
                        pltpu.VMEM((b_tile, 1), jnp.float32)],
        compiler_params=pltpu.CompilerParams(
            dimension_semantics=("parallel", "arbitrary"),
            vmem_limit_bytes=vmem1),
        cost_estimate=cost1,
    )(batch_rows, x_in, wl_p)

    # ---- Phase 2: out = Gamma(x) + onehot @ (-Lambda(xm)) ----
    vmem2 = _vmem_limit(
        2 * tile_n * din_p * x_itm + 2 * tile_n * 4
        + din_p * dout_p * 2 + dout_p * 4 + b_p * dout_p * 2
        + 2 * tile_n * dout_p * out_itm)
    cost2 = pl.CostEstimate(
        flops=2 * n_p * din_p * dout_p + 2 * n_p * b_p * dout_p,
        transcendentals=0,
        bytes_accessed=(n_p * din_p * x_itm + n_p * 4 + din_p * dout_p * 2
                        + dout_p * 4 + b_p * dout_p * 2
                        + n_p * dout_p * out_itm))
    out_p = pl.pallas_call(
        _apply_kernel,
        out_shape=jax.ShapeDtypeStruct((n_p, dout_p), out_dtype),
        grid=(nt,),
        in_specs=[
            pl.BlockSpec((tile_n, 1), lambda i: (i, 0)),
            # Sweep knob: pipeline_mode=pl.Buffered(3) here if phase 2 is
            # HBM-bound on x (small din) and VMEM headroom allows.
            pl.BlockSpec((tile_n, din_p), lambda i: (i, 0)),
            pl.BlockSpec((din_p, dout_p), lambda i: (0, 0),
                         pipeline_mode=pl.Buffered(1)),      # loop-invariant
            pl.BlockSpec((1, dout_p), lambda i: (0, 0),
                         pipeline_mode=pl.Buffered(1)),
            pl.BlockSpec((b_p, dout_p), lambda i: (0, 0),
                         pipeline_mode=pl.Buffered(1)),
        ],
        out_specs=pl.BlockSpec((tile_n, dout_p), lambda i: (i, 0)),
        compiler_params=pltpu.CompilerParams(
            dimension_semantics=("parallel",),
            vmem_limit_bytes=vmem2),
        cost_estimate=cost2,
    )(batch_col, x_in, wg_p, bg_p, neg_xm)

    if (n_p, dout_p) == (n, dout):
        return out_p
    return out_p[:n, :dout]


# --------------------------------------------------------------------------
# Pure-JAX reference (f32) and self-check
# --------------------------------------------------------------------------
def _reference(x, batch, w_gamma, b_gamma, w_lambda, num_graphs, aggregation_fn):
    sums = jnp.zeros((num_graphs, x.shape[1]), jnp.float32).at[batch].add(x)
    if aggregation_fn == "mean":
        cnt = jnp.zeros((num_graphs,), jnp.float32).at[batch].add(1.0)
        xm = sums / jnp.maximum(cnt, 1.0)[:, None]
    else:
        xm = sums
    xm = xm @ w_lambda
    gx = x @ w_gamma + b_gamma
    return gx - xm[batch, :]


if __name__ == "__main__":
    key = jax.random.PRNGKey(0)
    N, DIM_IN, DIM_OUT, NUM_GRAPHS = 16, 8, 8, 4

    k_x, k_wg, k_bg, k_wl, k_perm = jax.random.split(key, 5)
    x = jax.random.normal(k_x, (N, DIM_IN), dtype=jnp.float32)
    # Set assignment per element (permuted — kernel does not assume sorted).
    batch = jnp.repeat(jnp.arange(NUM_GRAPHS, dtype=jnp.int32), N // NUM_GRAPHS)
    batch = jax.random.permutation(k_perm, batch)

    # nn.Linear weight is (dim_out, dim_in); stored transposed as (dim_in, dim_out).
    bound = 1.0 / (DIM_IN ** 0.5)
    w_gamma = jax.random.uniform(k_wg, (DIM_IN, DIM_OUT), jnp.float32, -bound, bound)
    b_gamma = jax.random.uniform(k_bg, (DIM_OUT,), jnp.float32, -bound, bound)
    w_lambda = jax.random.uniform(k_wl, (DIM_IN, DIM_OUT), jnp.float32, -bound, bound)

    # Tolerances vs the f32 reference: bf16 MXU operands + bf16-rounded
    # Lambda(xm); "sum" aggregates have larger magnitudes so the bf16 relative
    # error scales accordingly (documented tradeoff).
    tols = {"mean": 3e-2, "sum": 6e-2}
    for agg in ("mean", "sum"):
        ref = _reference(x, batch, w_gamma, b_gamma, w_lambda, NUM_GRAPHS, agg)
        for tn in (1024, 8):   # single grid step & multi-step reduction axis
            out = deepset_layer(x, batch, w_gamma, b_gamma, w_lambda,
                                NUM_GRAPHS, agg, tile_n=tn)
            out = jax.block_until_ready(out)
            assert out.shape == (N, DIM_OUT)
            err = float(jnp.max(jnp.abs(out - ref)))
            assert jnp.allclose(out, ref, atol=tols[agg], rtol=tols[agg]), (
                f"mismatch agg={agg} tile_n={tn}: max abs err {err}")

    print("KERNEL_OK")
</pallas_src>

<mosaic_0001>
module attributes {stable_mosaic.version = 11 : i64} {
  func.func @_aggregate_kernel(%arg0: i32, %arg1: i32, %arg2: memref<1x1x16xi32, #tpu.memory_space<vmem>>, %arg3: memref<16x128xbf16, #tpu.memory_space<vmem>>, %arg4: memref<128x128xf32, #tpu.memory_space<vmem>>, %arg5: memref<16x128xbf16, #tpu.memory_space<vmem>>, %arg6: memref<16x128xf32, #tpu.memory_space<vmem>>, %arg7: memref<16x1xf32, #tpu.memory_space<vmem>>) attributes {dimension_semantics = [#tpu.dimension_semantics<parallel>, #tpu.dimension_semantics<arbitrary>], iteration_bounds = array<i64: 1, 1>, scalar_prefetch = 0 : i64, scratch_operands = 2 : i64, tpu.core_type = #tpu.core_type<tc>, window_params = [{transform_indices = @transform_0, window_bounds = array<i64: 1, 1, 16>}, {transform_indices = @transform_1, window_bounds = array<i64: 16, 128>}, {pipeline_mode = #tpu.pipeline_mode<synchronous>, transform_indices = @transform_2, window_bounds = array<i64: 128, 128>}, {transform_indices = @transform_3, window_bounds = array<i64: 16, 128>}]} {
    %c0_i32 = arith.constant 0 : i32
    %0 = arith.cmpi eq, %arg1, %c0_i32 : i32
    %1 = arith.extui %0 : i1 to i32
    %c0_i32_0 = arith.constant 0 : i32
    %2 = arith.cmpi ne, %1, %c0_i32_0 : i32
    scf.if %2 {
      %cst_16 = arith.constant 0.000000e+00 : f32
      %29 = vector.broadcast %cst_16 : f32 to vector<16x128xf32>
      %c0_17 = arith.constant 0 : index
      %c0_18 = arith.constant 0 : index
      %30 = vector.load %arg6[%c0_17, %c0_18] : memref<16x128xf32, #tpu.memory_space<vmem>>, vector<16x128xf32>
      tpu.vector_store %arg6[%c0_17, %c0_18], %29 {strides = array<i32>} : memref<16x128xf32, #tpu.memory_space<vmem>>, vector<16x128xf32>,
      %cst_19 = arith.constant 0.000000e+00 : f32
      %31 = vector.broadcast %cst_19 : f32 to vector<16x1xf32>
      %c0_20 = arith.constant 0 : index
      %c0_21 = arith.constant 0 : index
      %32 = vector.load %arg7[%c0_20, %c0_21] : memref<16x1xf32, #tpu.memory_space<vmem>>, vector<16x1xf32>
      tpu.vector_store %arg7[%c0_20, %c0_21], %31 {strides = array<i32>} : memref<16x1xf32, #tpu.memory_space<vmem>>, vector<16x1xf32>,
    } else {
    }
    %c0 = arith.constant 0 : index
    %c0_1 = arith.constant 0 : index
    %c0_2 = arith.constant 0 : index
    %3 = vector.load %arg2[%c0, %c0_1, %c0_2] : memref<1x1x16xi32, #tpu.memory_space<vmem>>, vector<1x1x16xi32>
    %4 = vector.shape_cast %3 : vector<1x1x16xi32> to vector<1x16xi32>
    %5 = tpu.iota {dimensions = array<i32: 0>} : vector<16x16xi32>
    %c16_i32 = arith.constant 16 : i32
    %6 = arith.muli %arg0, %c16_i32 : i32
    %7 = vector.broadcast %6 : i32 to vector<16x16xi32>
    %8 = arith.addi %5, %7 : vector<16x16xi32>
    %9 = vector.broadcast %4 : vector<1x16xi32> to vector<16x16xi32>
    %10 = arith.cmpi eq, %8, %9 : vector<16x16xi32>
    %c0_3 = arith.constant 0 : index
    %c0_4 = arith.constant 0 : index
    %11 = vector.load %arg6[%c0_3, %c0_4] : memref<16x128xf32, #tpu.memory_space<vmem>>, vector<16x128xf32>
    %12 = arith.extui %10 : vector<16x16xi1> to vector<16x16xi32>
    %13 = arith.sitofp %12 : vector<16x16xi32> to vector<16x16xf32>
    %14 = arith.truncf %13 : vector<16x16xf32> to vector<16x16xbf16>
    %c0_5 = arith.constant 0 : index
    %c0_6 = arith.constant 0 : index
    %15 = vector.load %arg3[%c0_5, %c0_6] : memref<16x128xbf16, #tpu.memory_space<vmem>>, vector<16x128xbf16>
    %cst = arith.constant dense<0.000000e+00> : vector<16x128xf32>
    %16 = tpu.matmul %14, %15, %cst {dimension_numbers = #tpu.dot_dimension_numbers<[1], [0], [0], [1], [0, 0, 1, 1], [], []>} : vector<16x16xbf16>, vector<16x128xbf16>, vector<16x128xf32> -> vector<16x128xf32>
    %17 = arith.addf %11, %16 : vector<16x128xf32>
    %c0_7 = arith.constant 0 : index
    %c0_8 = arith.constant 0 : index
    %18 = vector.load %arg6[%c0_7, %c0_8] : memref<16x128xf32, #tpu.memory_space<vmem>>, vector<16x128xf32>
    tpu.vector_store %arg6[%c0_7, %c0_8], %17 {strides = array<i32>} : memref<16x128xf32, #tpu.memory_space<vmem>>, vector<16x128xf32>,
    %c0_9 = arith.constant 0 : index
    %c0_10 = arith.constant 0 : index
    %19 = vector.load %arg7[%c0_9, %c0_10] : memref<16x1xf32, #tpu.memory_space<vmem>>, vector<16x1xf32>
    %20 = arith.extui %10 : vector<16x16xi1> to vector<16x16xi32>
    %21 = arith.sitofp %20 : vector<16x16xi32> to vector<16x16xf32>
    %cst_11 = arith.constant dense<0.000000e+00> : vector<16xf32>
    %22 = vector.multi_reduction <add>, %21, %cst_11 [1] : vector<16x16xf32> to vector<16xf32>
    %23 = vector.shape_cast %22 : vector<16xf32> to vector<16x1xf32>
    %24 = arith.addf %19, %23 : vector<16x1xf32>
    %c0_12 = arith.constant 0 : index
    %c0_13 = arith.constant 0 : index
    %25 = vector.load %arg7[%c0_12, %c0_13] : memref<16x1xf32, #tpu.memory_space<vmem>>, vector<16x1xf32>
    tpu.vector_store %arg7[%c0_12, %c0_13], %24 {strides = array<i32>} : memref<16x1xf32, #tpu.memory_space<vmem>>, vector<16x1xf32>,
    %c0_i32_14 = arith.constant 0 : i32
    %26 = arith.cmpi eq, %arg1, %c0_i32_14 : i32
    %27 = arith.extui %26 : i1 to i32
    %c0_i32_15 = arith.constant 0 : i32
    %28 = arith.cmpi ne, %27, %c0_i32_15 : i32
    scf.if %28 {
      %c0_16 = arith.constant 0 : index
      %c0_17 = arith.constant 0 : index
      %29 = vector.load %arg6[%c0_16, %c0_17] : memref<16x128xf32, #tpu.memory_space<vmem>>, vector<16x128xf32>
      %c0_18 = arith.constant 0 : index
      %c0_19 = arith.constant 0 : index
      %30 = vector.load %arg7[%c0_18, %c0_19] : memref<16x1xf32, #tpu.memory_space<vmem>>, vector<16x1xf32>
      %cst_20 = arith.constant 1.000000e+00 : f32
      %31 = vector.broadcast %cst_20 : f32 to vector<16x1xf32>
      %32 = arith.maximumf %30, %31 : vector<16x1xf32>
      %33 = vector.broadcast %32 : vector<16x1xf32> to vector<16x128xf32>
      %34 = arith.divf %29, %33 : vector<16x128xf32>
      %c0_21 = arith.constant 0 : index
      %c0_22 = arith.constant 0 : index
      %35 = vector.load %arg4[%c0_21, %c0_22] : memref<128x128xf32, #tpu.memory_space<vmem>>, vector<128x128xf32>
      %cst_23 = arith.constant dense<0.000000e+00> : vector<16x128xf32>
      %36 = tpu.matmul %34, %35, %cst_23 {dimension_numbers = #tpu.dot_dimension_numbers<[1], [0], [0], [1], [0, 0, 1, 1], [], []>} : vector<16x128xf32>, vector<128x128xf32>, vector<16x128xf32> -> vector<16x128xf32>
      %cst_24 = arith.constant 0.000000e+00 : f32
      %37 = vector.broadcast %cst_24 : f32 to vector<16x128xf32>
      %38 = arith.subf %37, %36 : vector<16x128xf32>
      %39 = arith.truncf %38 : vector<16x128xf32> to vector<16x128xbf16>
      %c0_25 = arith.constant 0 : index
      %c0_26 = arith.constant 0 : index
      %40 = vector.load %arg5[%c0_25, %c0_26] : memref<16x128xbf16, #tpu.memory_space<vmem>>, vector<16x128xbf16>
      tpu.vector_store %arg5[%c0_25, %c0_26], %39 {strides = array<i32>} : memref<16x128xbf16, #tpu.memory_space<vmem>>, vector<16x128xbf16>,
    } else {
    }
    return
  }
  func.func @transform_0(%arg0: i32, %arg1: i32) -> (i32, i32, i32) {
    %c0_i32 = arith.constant 0 : i32
    %c0_i32_0 = arith.constant 0 : i32
    %c0_i32_1 = arith.constant 0 : i32
    return %arg1, %c0_i32, %c0_i32_0 : i32, i32, i32
  }
  func.func @transform_1(%arg0: i32, %arg1: i32) -> (i32, i32) {
    %c0_i32 = arith.constant 0 : i32
    %c0_i32_0 = arith.constant 0 : i32
    return %arg1, %c0_i32 : i32, i32
  }
  func.func @transform_2(%arg0: i32, %arg1: i32) -> (i32, i32) {
    %c0_i32 = arith.constant 0 : i32
    %c0_i32_0 = arith.constant 0 : i32
    %c0_i32_1 = arith.constant 0 : i32
    return %c0_i32, %c0_i32_0 : i32, i32
  }
  func.func @transform_3(%arg0: i32, %arg1: i32) -> (i32, i32) {
    %c0_i32 = arith.constant 0 : i32
    %c0_i32_0 = arith.constant 0 : i32
    return %arg0, %c0_i32 : i32, i32
  }
}

</mosaic_0001>

<llo_original>
// kernel: tpu_custom_call.1
$region0: #{tpu_custom_call.1}
  #allocation0 [shape = 'u32[]', space=smem, size = 0x4, offset = 0x4, fixed_abs, tag = 'smem constant byte address 0x4 - core index']
  #allocation1 [shape = 'u32[72,128]{1,0:T(1,128)}', space=vmem, size = 0x9000, scoped, tag = 'internal scratch']
  #allocation2 [shape = 'f32[16,128]{1,0:T(8,128)}', space=vmem, size = 0x2000, scoped, tag = 'scratch operand']
  #allocation3 [shape = 'f32[16,1]{1,0:T(8,128)}', space=vmem, size = 0x2000, scoped, tag = 'scratch operand']
  %s0 = inlined_call_operand.hbm [shape: s32[1,1,16], index: 0, kind: input, shape index: {}]
  %s1 = inlined_call_operand.hbm [shape: bf16[16,128], index: 1, kind: input, shape index: {}]
  %s2 = inlined_call_operand.hbm [shape: f32[128,128], index: 2, kind: input, shape index: {}]
  %s3 = inlined_call_operand.hbm [shape: bf16[16,128], index: 3, kind: output, shape index: {}]
  %s4 = sld [smem:[#allocation0]]
  $region42: #{tpu_custom_call.1} parent=0
    _
  %s6 = ssub.s32 1, %s4
  %s7 = scalar_select 0, %s6, %s4
  $region1: #{tpu_custom_call.1} parent=0
    #allocation4 [shape = 'u8[512]{0}', space=vmem, size = 0x400, scoped, tag = 'input window, operand 0, single buffered']
    #allocation5 [shape = 's32[1]{0}', space=sflag, size = 0x4, scoped, tag = 'scoped memory for tpu_custom_call.1']
    #allocation6 [shape = 's32[1]{0}', space=sflag, size = 0x4, scoped, tag = 'scoped memory for tpu_custom_call.1']
    #allocation7 [shape = 'u8[4096]{0}', space=vmem, size = 0x1000, scoped, tag = 'input window, operand 1, single buffered']
    #allocation8 [shape = 's32[1]{0}', space=sflag, size = 0x4, scoped, tag = 'scoped memory for tpu_custom_call.1']
    #allocation9 [shape = 'u8[65536]{0}', space=vmem, size = 0x10000, scoped, tag = 'input window, operand 2, single buffered']
    #allocation10 [shape = 'u8[4096]{0}', space=vmem, size = 0x1000, scoped, tag = 'output window, operand 0, single buffered']
    %8 = vsyncpa [#allocation5], 0
    %9 = vsyncpa [#allocation8], 0
    %10 = vsyncpa [#allocation6], 0
    // Predicated region
    $region2: #{tpu_custom_call.1} parent=1 // pred_check
      _
    $region3: #{tpu_custom_call.1} parent=1 // pred_check_branch
      %12 = sbr.rel (0) target = $region5
    $region4: #{tpu_custom_call.1} parent=1 // pred_region
      %14 = vsyncadd [#allocation5], 0
      %s16 = sshll.u32 %s0, 4
      %s17 = int_to_ptr.hbm [resolvable:$true] %s16
      %s18 = sshll.u32 [#allocation4], 4
      %s19 = int_to_ptr.vmem [resolvable:$true] %s18
      %21 = dma.hbm_to_vmem [thread:$0]  %s17, 16, %s19, [#allocation5]
    $region5: #{tpu_custom_call.1} parent=1 // pred_fallthru
      _
    // Predicated region
    $region6: #{tpu_custom_call.1} parent=1 // pred_check
      _
    $region7: #{tpu_custom_call.1} parent=1 // pred_check_branch
      %23 = sbr.rel (0) target = $region9
    $region8: #{tpu_custom_call.1} parent=1 // pred_region
      %25 = vsyncadd [#allocation8], 0
      %s26 = sshll.u32 %s1, 4
      %s27 = int_to_ptr.hbm [resolvable:$true] %s26
      %s28 = sshll.u32 [#allocation7], 4
      %s29 = int_to_ptr.vmem [resolvable:$true] %s28
      %34 = dma.hbm_to_vmem [thread:$0]  %s27, 128, %s29, [#allocation8], 64, 64, 4
    $region9: #{tpu_custom_call.1} parent=1 // pred_fallthru
      _
    // Predicated region
    $region10: #{tpu_custom_call.1} parent=1 // pred_check
      _
    $region11: #{tpu_custom_call.1} parent=1 // pred_check_branch
      %36 = sbr.rel (0) target = $region13
    $region12: #{tpu_custom_call.1} parent=1 // pred_region
      %38 = vsyncadd [#allocation8], 0
      %s39 = sshll.u32 %s2, 4
      %s40 = int_to_ptr.hbm [resolvable:$true] %s39
      %s41 = sshll.u32 [#allocation9], 4
      %s42 = int_to_ptr.vmem [resolvable:$true] %s41
      %47 = dma.hbm_to_vmem [thread:$0]  %s40, 2048, %s42, [#allocation8], 128, 128, 8
    $region13: #{tpu_custom_call.1} parent=1 // pred_fallthru
      _
    // Predicated region
    $region14: #{tpu_custom_call.1} parent=1 // pred_check
      _
    $region15: #{tpu_custom_call.1} parent=1 // pred_check_branch
      %49 = sbr.rel (0) target = $region17
    $region16: #{tpu_custom_call.1} parent=1 // pred_region
      %51 = dma.done [#allocation5], 16
    $region17: #{tpu_custom_call.1} parent=1 // pred_fallthru
      _
    // Predicated region
    $region18: #{tpu_custom_call.1} parent=1 // pred_check
      _
    $region19: #{tpu_custom_call.1} parent=1 // pred_check_branch
      %53 = sbr.rel (0) target = $region21
    $region20: #{tpu_custom_call.1} parent=1 // pred_region
      %55 = dma.done [#allocation8], 128
    $region21: #{tpu_custom_call.1} parent=1 // pred_fallthru
      _
    // Predicated region
    $region22: #{tpu_custom_call.1} parent=1 // pred_check
      _
    $region23: #{tpu_custom_call.1} parent=1 // pred_check_branch
      %57 = sbr.rel (0) target = $region25
    $region24: #{tpu_custom_call.1} parent=1 // pred_region
      %59 = dma.done [#allocation8], 2048
    $region25: #{tpu_custom_call.1} parent=1 // pred_fallthru
      _
    %p61 = scmp.eq.s32.totalorder 0, 0
    // Predicated region
    $region26: #{tpu_custom_call.1} parent=1 // pred_check
      %p62 = pneg %p61
    $region27: #{tpu_custom_call.1} parent=1 // pred_check_branch
      %64 = sbr.rel (%p62) target = $region29
    $region28: #{tpu_custom_call.1} parent=1 // pred_region
      %65 = vst [vmem:[#allocation2] sm:$0xff] 0.0
      %66 = vst [vmem:[#allocation2 + $0x8] sm:$0xff] 0.0
      %vm67 = vcmask 7168
      %68 = vst.msk [vmem:[#allocation3] sm:$0xff] %vm67, 0.0
      %69 = vst.msk [vmem:[#allocation3 + $0x8] sm:$0xff] %vm67, 0.0
    $region29: #{tpu_custom_call.1} parent=1 // pred_fallthru
      _
    %v70 = vld [vmem:[#allocation4] sm:$0x1]
    %v71 = vlaneseq
    %v72 = vshrl.u32 %v71, 7
    %v73 = vadd.s32 %v72, 8
    %s74 = smul.u32 0, 16
    %v75 = vstv %s74
    %v76 = vadd.s32 %v72, %v75
    %v77 = vadd.s32 %v73, %v75
    %v78 = vperm.slane %v70, 0
    %vm79 = vcmp.eq.s32.totalorder %v76, %v78
    %vm80 = vcmp.eq.s32.totalorder %v77, %v78
    %v81 = vld [vmem:[#allocation2] sm:$0xff]
    %v82 = vld [vmem:[#allocation2 + $0x8] sm:$0xff]
    %v83 = vsel %vm79, 1, 0
    %v84 = vsel %vm80, 1, 0
    %v85 = vcvt.s32.f32 %v83
    %v86 = vcvt.s32.f32 %v84
    %v87 = vpack.c.bf16 %v86, %v85
    %v88 = vld [vmem:[#allocation7] sm:$0xf]
    %v89 = vld [vmem:[#allocation7 + $0x4] sm:$0xf]
    %v92 = vunpack.c.l.b16 %v88
    %v93 = vunpack.c.l.b16 %v89
    %v94 = vpack.c.b16 %v93, %v92
    %vm96 = vcmask 130048
    %v98 = vsel %vm96, %v87, 0
    %100 = vmatpush.bf16.msra.mxu0 0
    %101 = vmatpush.bf16.msra.mxu0 0
    %102 = vmatpush.bf16.msra.mxu0 0
    %103 = vmatpush.bf16.msra.mxu0 0
    %104 = vmatpush.bf16.msra.mxu0 0
    %105 = vmatpush.bf16.msra.mxu0 0
    %106 = vmatpush.bf16.msra.mxu0 0
    %107 = vmatpush.bf16.msra.mxu0 %v94
    %108 = vmatmul.bf16.gmra.mxu0 %v98
    %v109 = vpop.f32.mrf.mxu0
    %v110 = vadd.f32 0.0, %v109
    %v111 = vpop.f32.mrf.mxu0
    %v112 = vadd.f32 0.0, %v111
    %113 = vdwg.mxu0
    %v114 = vadd.f32 %v81, %v110
    %v115 = vadd.f32 %v82, %v112
    %116 = vst [vmem:[#allocation2] sm:$0xff] %v114
    %117 = vst [vmem:[#allocation2 + $0x8] sm:$0xff] %v115
    %v118 = vld [vmem:[#allocation3] sm:$0xff]
    %v119 = vld [vmem:[#allocation3 + $0x8] sm:$0xff]
    %v120 = vsel %vm96, %v85, 0.0
    %121 = vadd.xlane.f32.xlu0 %v120
    %v122 = vpop.xlane.xlu0 %121
    %v123 = vsel %vm96, %v86, 0.0
    %124 = vadd.xlane.f32.xlu0 %v123
    %v125 = vpop.xlane.xlu0 %124
    %v126 = vadd.f32 %v118, %v122
    %v127 = vadd.f32 %v119, %v125
    %vm128 = vcmask 7168
    %129 = vst.msk [vmem:[#allocation3] sm:$0xff] %vm128, %v126
    %130 = vst.msk [vmem:[#allocation3 + $0x8] sm:$0xff] %vm128, %v127
    // Predicated region
    $region30: #{tpu_custom_call.1} parent=1 // pred_check
      %p131 = pneg %p61
    $region31: #{tpu_custom_call.1} parent=1 // pred_check_branch
      %133 = sbr.rel (%p131) target = $region33
    $region32: #{tpu_custom_call.1} parent=1 // pred_region
      %v134 = vld [vmem:[#allocation2] sm:$0xff]
      %v135 = vld [vmem:[#allocation2 + $0x8] sm:$0xff]
      %v136 = vld [vmem:[#allocation3] sm:$0xff]
      %v137 = vld [vmem:[#allocation3 + $0x8] sm:$0xff]
      %v138 = vmax.f32 %v136, 1.0
      %v139 = vmax.f32 %v137, 1.0
      %141 = vset.pattern.permute.xlu0 0
      %142 = vperm.xlu0 %141, %v138
      %v143 = vpop.permute.xlu0 %142
      %146 = vset.pattern.permute.xlu0 0
      %147 = vperm.xlu0 %146, %v139
      %v148 = vpop.permute.xlu0 %147
      %v150 = vrcp.pop %v143
      %v151 = vmul.f32 %v143, %v150
      %v152 = vsub.f32 1.0, %v151
      %v153 = vmul.f32 %v150, %v152
      %v154 = vadd.f32 %v150, %v153
      %vm155 = vweird.f32 %v143
      %vm156 = vweird.f32 %v150
      %vm157 = vmor %vm155, %vm156
      %v158 = vsel %vm157, %v150, %v154
      %v159 = vand.u32 2147483647, %v143
      %vm160 = vcmp.eq.f32.partialorder %v159, 8.507059e+37
      %v161 = vand.u32 %v143, 2147483648
      %v162 = vor.u32 1.1754944e-38, %v161
      %v163 = vsel %vm160, %v162, %v158
      %v164 = vmul.f32 %v134, %v163
      %v165 = vrcp.pop %v148
      %v166 = vmul.f32 %v148, %v165
      %v167 = vsub.f32 1.0, %v166
      %v168 = vmul.f32 %v165, %v167
      %v169 = vadd.f32 %v165, %v168
      %vm170 = vweird.f32 %v148
      %vm171 = vweird.f32 %v165
      %vm172 = vmor %vm170, %vm171
      %v173 = vsel %vm172, %v165, %v169
      %v174 = vand.u32 2147483647, %v148
      %vm175 = vcmp.eq.f32.partialorder %v174, 8.507059e+37
      %v176 = vand.u32 %v148, 2147483648
      %v177 = vor.u32 1.1754944e-38, %v176
      %v178 = vsel %vm175, %v177, %v173
      %v179 = vmul.f32 %v135, %v178
      %v180 = vld [vmem:[#allocation9] sm:$0xff]
      %v181 = vld [vmem:[#allocation9 + $0x8] sm:$0xff]
      %v182 = vld [vmem:[#allocation9 + $0x10] sm:$0xff]
      %v183 = vld [vmem:[#allocation9 + $0x18] sm:$0xff]
      %v184 = vld [vmem:[#allocation9 + $0x20] sm:$0xff]
      %v185 = vld [vmem:[#allocation9 + $0x28] sm:$0xff]
      %v186 = vld [vmem:[#allocation9 + $0x30] sm:$0xff]
      %v187 = vld [vmem:[#allocation9 + $0x38] sm:$0xff]
      %v188 = vld [vmem:[#allocation9 + $0x40] sm:$0xff]
      %v189 = vld [vmem:[#allocation9 + $0x48] sm:$0xff]
      %v190 = vld [vmem:[#allocation9 + $0x50] sm:$0xff]
      %v191 = vld [vmem:[#allocation9 + $0x58] sm:$0xff]
      %v192 = vld [vmem:[#allocation9 + $0x60] sm:$0xff]
      %v193 = vld [vmem:[#allocation9 + $0x68] sm:$0xff]
      %v194 = vld [vmem:[#allocation9 + $0x70] sm:$0xff]
      %v195 = vld [vmem:[#allocation9 + $0x78] sm:$0xff]
      %196 = vmatpush.msra.mxu0 %v195
      %197 = vmatpush.msra.mxu0 %v194
      %198 = vmatpush.msra.mxu0 %v193
      %199 = vmatpush.msra.mxu0 %v192
      %200 = vmatpush.msra.mxu0 %v191
      %201 = vmatpush.msra.mxu0 %v190
      %202 = vmatpush.msra.mxu0 %v189
      %203 = vmatpush.msra.mxu0 %v188
      %204 = vmatpush.msra.mxu0 %v187
      %205 = vmatpush.msra.mxu0 %v186
      %206 = vmatpush.msra.mxu0 %v185
      %207 = vmatpush.msra.mxu0 %v184
      %208 = vmatpush.msra.mxu0 %v183
      %209 = vmatpush.msra.mxu0 %v182
      %210 = vmatpush.msra.mxu0 %v181
      %211 = vmatpush.msra.mxu0 %v180
      %212 = vmatmul.f32.gmra.mxu0 %v164
      %v213 = vpop.f32.mrf.mxu0
      %v214 = vadd.f32 0.0, %v213
      %215 = vmatmul.f32.gmra.mxu0 %v179
      %v216 = vpop.f32.mrf.mxu0
      %v217 = vadd.f32 0.0, %v216
      %218 = vdwg.mxu0
      %v219 = vsub.f32 0.0, %v214
      %v220 = vsub.f32 0.0, %v217
      %v221 = vpack.c.bf16 %v219, %v219
      %v222 = vpack.c.bf16 %v220, %v220
      %223 = vst [vmem:[#allocation10] sm:$0xf] %v221
      %224 = vst [vmem:[#allocation10 + $0x4] sm:$0xf] %v222
    $region33: #{tpu_custom_call.1} parent=1 // pred_fallthru
      _
    // Predicated region
    $region34: #{tpu_custom_call.1} parent=1 // pred_check
      _
    $region35: #{tpu_custom_call.1} parent=1 // pred_check_branch
      %226 = sbr.rel (0) target = $region37
    $region36: #{tpu_custom_call.1} parent=1 // pred_region
      %228 = vsyncadd [#allocation6], 0
      %s229 = sshll.u32 [#allocation10], 4
      %s230 = int_to_ptr.vmem [resolvable:$true] %s229
      %s231 = sshll.u32 %s3, 4
      %s232 = int_to_ptr.hbm [resolvable:$true] %s231
      %237 = dma.vmem_to_hbm [thread:$0]  %s230, 128, %s232, [#allocation6], 64, 64, 4
    $region37: #{tpu_custom_call.1} parent=1 // pred_fallthru
      _
    // Predicated region
    $region38: #{tpu_custom_call.1} parent=1 // pred_check
      _
    $region39: #{tpu_custom_call.1} parent=1 // pred_check_branch
      %239 = sbr.rel (0) target = $region41
    $region40: #{tpu_custom_call.1} parent=1 // pred_region
      %241 = dma.done [#allocation6], 128
    $region41: #{tpu_custom_call.1} parent=1 // pred_fallthru
      _
    %242 = vsyncpa [#allocation5], 1
    %243 = vsyncpa [#allocation8], 1
    %244 = vsyncpa [#allocation6], 1

</llo_original>
